<compile_context>
chip_gen: v7x
topology: tpu7x:2x2x1
jax: 0.10.0
libtpu: 0.0.40
codegen_flags: <defaults>
</compile_context>

<pallas_src>
import functools

import jax
import jax.numpy as jnp
import numpy as np
from jax import lax
from jax.experimental import pallas as pl
from jax.experimental.pallas import tpu as pltpu


def _round_up(x: int, m: int) -> int:
    return (x + m - 1) // m * m


def _vmem_ceiling_bytes() -> int:
    """Generation-aware VMEM ceiling (85% of physical per-core capacity)."""
    try:
        cap = int(pltpu.get_tpu_info().vmem_capacity_bytes)
    except Exception:
        cap = 64 << 20  # conservative fallback: v7x per-TensorCore VMEM
    return int(cap * 0.85)


def _pick_d_block(d_pad: int) -> int:
    """Lane-dense slab width (multiple of 128); >= 2 slabs whenever possible so
    the 'parallel' grid axis can shard across v7x's two TensorCores."""
    if d_pad <= 128:
        return d_pad
    cand = min(512, _round_up(d_pad // 2, 128))
    while d_pad % cand != 0:
        cand -= 128
    return max(cand, 128)


def _resident_a_spec(n_pad: int) -> pl.BlockSpec:
    """A_hat BlockSpec: constant index_map -> single-buffer (no refetch ever)."""
    if hasattr(pl, "Buffered"):
        try:
            return pl.BlockSpec((n_pad, n_pad), lambda j: (0, 0),
                                pipeline_mode=pl.Buffered(1))
        except TypeError:  # older BlockSpec without pipeline_mode kwarg
            pass
    return pl.BlockSpec((n_pad, n_pad), lambda j: (0, 0))


# --------------------------------------------------------------------------- #
# Pallas kernel: one invocation = full prop_step propagation for one column slab
# --------------------------------------------------------------------------- #
def _make_prop_kernel(c_y: float, c_x: float, prop_step: int, activate: bool,
                      unroll: int):
    """Recurrence: Y <- c_y*Y + (c_ay*A_hat) @ Y + c_x*X  (c_ay folded into A)."""

    def kernel(a_ref, x_ref, o_ref):
        def body(_, y):
            # MXU matmul, f32 accumulation; operands read straight from VMEM.
            ay = jnp.dot(a_ref[...], y.astype(a_ref.dtype),
                         preferred_element_type=jnp.float32)
            # c_x * X computed per step from the ref: nothing slab-sized besides
            # the carry stays live across the unrolled loop.
            y_new = ay + c_x * x_ref[...]
            if c_y != 0.0:        # static; c_y == 0 for the default alp = 1/(lam+1)
                y_new = y_new + c_y * y
            if activate:
                y_new = jnp.maximum(y_new, 0.0)
            return y_new

        # Y^(0) = X; serially-dependent short loop, capped unroll.
        y = lax.fori_loop(0, prop_step, body, x_ref[...], unroll=unroll)
        o_ref[...] = y.astype(o_ref.dtype)

    return kernel


# --------------------------------------------------------------------------- #
# Wrapper
# --------------------------------------------------------------------------- #
def unfolding_and_attention_forward(
    ahat: jax.Array,              # (N, N) dense normalized adjacency, f32
    x: jax.Array,                 # (N, d) node features, f32
    *,
    alp: float,
    lam: float,
    prop_step: int,
    activate: bool,
    matmul_dtype=jnp.bfloat16,    # MXU operand dtype (accumulation is always f32)
):
    n, d = x.shape
    assert ahat.shape == (n, n)

    c_y = 1.0 - alp * (lam + 1.0)
    c_ay = alp * lam
    c_x = alp

    # Pad N to 128 (lane dim of A_hat and MXU contraction dim -> dense vregs,
    # full K-tiles) and d to 128 (lane-dense unmasked stores). Zero padding is
    # exact for this recurrence (padded rows/cols stay identically zero).
    n_pad = _round_up(max(n, 128), 128)
    d_pad = _round_up(max(d, 128), 128)

    # One-time wrapper work, amortized over prop_step reuses of A_hat.
    a_scaled = (c_ay * ahat).astype(matmul_dtype)
    a_scaled = jnp.pad(a_scaled, ((0, n_pad - n), (0, n_pad - n)))
    x_pad = jnp.pad(x.astype(jnp.float32), ((0, n_pad - n), (0, d_pad - d)))

    d_block = _pick_d_block(d_pad)
    n_blocks = d_pad // d_block

    # VMEM budget:
    #   A_hat          : single-buffered (constant block)            -> a_bytes
    #   X / out slabs  : double-buffered pipeline                    -> 4 * slab
    #   in-kernel live : f32 carry y, f32 matmul result, operand cast,
    #                    c_x*X term                                  -> ~4 * slab
    a_bytes = n_pad * n_pad * jnp.dtype(matmul_dtype).itemsize
    slab_bytes = n_pad * d_block * 4
    need = a_bytes + 8 * slab_bytes + (2 << 20)

    ceiling = _vmem_ceiling_bytes()
    if need > ceiling:
        # TODO(synk): HBM-streaming fallback (row-tile A_hat via pltpu.emit_pipeline)
        # for graphs whose adjacency does not fit VMEM; fail loudly for now.
        raise NotImplementedError(
            f"A_hat-resident kernel needs ~{need >> 20} MiB VMEM > "
            f"ceiling {ceiling >> 20} MiB; streaming path not implemented.")
    vmem_limit = int(max(need, 4 << 20))

    unroll = max(1, min(prop_step, 8))
    kernel = _make_prop_kernel(c_y, c_x, prop_step, activate, unroll)

    out = pl.pallas_call(
        kernel,
        out_shape=jax.ShapeDtypeStruct((n_pad, d_pad), jnp.float32),
        grid=(n_blocks,),
        in_specs=[
            _resident_a_spec(n_pad),                             # A_hat: resident, 1-buffered
            pl.BlockSpec((n_pad, d_block), lambda j: (0, j)),    # X column slab
        ],
        out_specs=pl.BlockSpec((n_pad, d_block), lambda j: (0, j)),
        compiler_params=pltpu.CompilerParams(
            dimension_semantics=("parallel",),   # column slabs are independent
            vmem_limit_bytes=vmem_limit,
        ),
    )(a_scaled, x_pad)

    return out[:n, :d]


# --------------------------------------------------------------------------- #
# Glue: deterministic synthetic graph and its normalized adjacency
# --------------------------------------------------------------------------- #
def build_normalized_adjacency(key, n: int) -> jax.Array:
    """Dense A_hat = D^{-1/2} A D^{-1/2}, edge weights == 1, D = in-degrees."""
    a = jnp.zeros((n, n), dtype=jnp.float32)
    idx = jnp.arange(n)
    a = a.at[idx, idx].set(1.0)                       # self loops
    a = a.at[(idx + 1) % n, idx].set(1.0)             # ring edges src -> src+1
    rnd = jax.random.bernoulli(key, p=0.2, shape=(n, n)).astype(jnp.float32)
    a = jnp.maximum(a, rnd)                           # extra random edges
    deg = a.sum(axis=1)                               # in-degrees (g.in_degrees())
    norm = jnp.power(deg, -0.5)
    norm = jnp.where(jnp.isinf(norm), 0.0, norm)      # matches D_power_X inf -> 0
    return norm[:, None] * a * norm[None, :]


def reference_forward(ahat, x, alp, lam, prop_step, activate):
    y = x
    for _ in range(prop_step):
        y = (1.0 - alp * (lam + 1.0)) * y + alp * lam * (ahat @ y) + alp * x
        if activate:
            y = jnp.maximum(y, 0.0)
    return y


# --------------------------------------------------------------------------- #
if __name__ == "__main__":
    # Module hyper-parameters (static).
    d = 32
    lam = 1.0
    alp = -1.0
    alp = alp if alp > 0 else 1.0 / (lam + 1.0)       # module default: 1/(lam+1)
    prop_step = 4
    activate = True
    use_eta = True

    # Deterministic parameter init per __init__: etas = ones(d). It only feeds the
    # Attention layers, which are disabled in this configuration.
    etas = jnp.ones((d,), dtype=jnp.float32)

    key = jax.random.PRNGKey(0)
    k_graph, k_feat = jax.random.split(key)

    n_nodes = 16
    ahat = build_normalized_adjacency(k_graph, n_nodes)              # (16, 16)
    x = jax.random.normal(k_feat, (n_nodes, d), dtype=jnp.float32)   # (16, 32)

    y_ref = reference_forward(ahat, x, alp, lam, prop_step, activate)

    # f32 MXU-operand path: exact semantics of the PyTorch module.
    run_f32 = jax.jit(functools.partial(
        unfolding_and_attention_forward, alp=alp, lam=lam,
        prop_step=prop_step, activate=activate, matmul_dtype=jnp.float32))
    y_f32 = jax.block_until_ready(run_f32(ahat, x))
    np.testing.assert_allclose(np.asarray(y_f32), np.asarray(y_ref),
                               rtol=1e-5, atol=1e-5)

    # bf16 MXU-operand path (default, recommended on v5e/v6e/v7x); f32 accumulation.
    run_bf16 = jax.jit(functools.partial(
        unfolding_and_attention_forward, alp=alp, lam=lam,
        prop_step=prop_step, activate=activate, matmul_dtype=jnp.bfloat16))
    y_bf16 = jax.block_until_ready(run_bf16(ahat, x))
    np.testing.assert_allclose(np.asarray(y_bf16), np.asarray(y_ref),
                               rtol=5e-2, atol=5e-2)

    print("KERNEL_OK")
</pallas_src>

<mosaic_0001>
module attributes {stable_mosaic.version = 11 : i64} {
  func.func @kernel(%arg0: i32, %arg1: memref<128x128xf32, #tpu.memory_space<vmem>>, %arg2: memref<128x128xf32, #tpu.memory_space<vmem>>, %arg3: memref<128x128xf32, #tpu.memory_space<vmem>>) attributes {dimension_semantics = [#tpu.dimension_semantics<parallel>], iteration_bounds = array<i64: 1>, scalar_prefetch = 0 : i64, scratch_operands = 0 : i64, tpu.core_type = #tpu.core_type<tc>, window_params = [{pipeline_mode = #tpu.pipeline_mode<synchronous>, transform_indices = @transform_0, window_bounds = array<i64: 128, 128>}, {transform_indices = @transform_1, window_bounds = array<i64: 128, 128>}, {transform_indices = @transform_2, window_bounds = array<i64: 128, 128>}]} {
    %c0 = arith.constant 0 : index
    %c0_0 = arith.constant 0 : index
    %0 = vector.load %arg2[%c0, %c0_0] : memref<128x128xf32, #tpu.memory_space<vmem>>, vector<128x128xf32>
    %c0_i32 = arith.constant 0 : i32
    %c0_1 = arith.constant 0 : index
    %c0_2 = arith.constant 0 : index
    %1 = vector.load %arg1[%c0_1, %c0_2] : memref<128x128xf32, #tpu.memory_space<vmem>>, vector<128x128xf32>
    %cst = arith.constant dense<0.000000e+00> : vector<128x128xf32>
    %2 = tpu.matmul %1, %0, %cst {dimension_numbers = #tpu.dot_dimension_numbers<[1], [0], [0], [1], [0, 0, 1, 1], [], []>} : vector<128x128xf32>, vector<128x128xf32>, vector<128x128xf32> -> vector<128x128xf32>
    %c0_3 = arith.constant 0 : index
    %c0_4 = arith.constant 0 : index
    %3 = vector.load %arg2[%c0_3, %c0_4] : memref<128x128xf32, #tpu.memory_space<vmem>>, vector<128x128xf32>
    %cst_5 = arith.constant 5.000000e-01 : f32
    %4 = vector.broadcast %cst_5 : f32 to vector<128x128xf32>
    %5 = arith.mulf %4, %3 : vector<128x128xf32>
    %6 = arith.addf %2, %5 : vector<128x128xf32>
    %cst_6 = arith.constant 0.000000e+00 : f32
    %7 = vector.broadcast %cst_6 : f32 to vector<128x128xf32>
    %8 = arith.maximumf %6, %7 : vector<128x128xf32>
    %c1_i32 = arith.constant 1 : i32
    %c0_7 = arith.constant 0 : index
    %c0_8 = arith.constant 0 : index
    %9 = vector.load %arg1[%c0_7, %c0_8] : memref<128x128xf32, #tpu.memory_space<vmem>>, vector<128x128xf32>
    %cst_9 = arith.constant dense<0.000000e+00> : vector<128x128xf32>
    %10 = tpu.matmul %9, %8, %cst_9 {dimension_numbers = #tpu.dot_dimension_numbers<[1], [0], [0], [1], [0, 0, 1, 1], [], []>} : vector<128x128xf32>, vector<128x128xf32>, vector<128x128xf32> -> vector<128x128xf32>
    %c0_10 = arith.constant 0 : index
    %c0_11 = arith.constant 0 : index
    %11 = vector.load %arg2[%c0_10, %c0_11] : memref<128x128xf32, #tpu.memory_space<vmem>>, vector<128x128xf32>
    %cst_12 = arith.constant 5.000000e-01 : f32
    %12 = vector.broadcast %cst_12 : f32 to vector<128x128xf32>
    %13 = arith.mulf %12, %11 : vector<128x128xf32>
    %14 = arith.addf %10, %13 : vector<128x128xf32>
    %cst_13 = arith.constant 0.000000e+00 : f32
    %15 = vector.broadcast %cst_13 : f32 to vector<128x128xf32>
    %16 = arith.maximumf %14, %15 : vector<128x128xf32>
    %c2_i32 = arith.constant 2 : i32
    %c0_14 = arith.constant 0 : index
    %c0_15 = arith.constant 0 : index
    %17 = vector.load %arg1[%c0_14, %c0_15] : memref<128x128xf32, #tpu.memory_space<vmem>>, vector<128x128xf32>
    %cst_16 = arith.constant dense<0.000000e+00> : vector<128x128xf32>
    %18 = tpu.matmul %17, %16, %cst_16 {dimension_numbers = #tpu.dot_dimension_numbers<[1], [0], [0], [1], [0, 0, 1, 1], [], []>} : vector<128x128xf32>, vector<128x128xf32>, vector<128x128xf32> -> vector<128x128xf32>
    %c0_17 = arith.constant 0 : index
    %c0_18 = arith.constant 0 : index
    %19 = vector.load %arg2[%c0_17, %c0_18] : memref<128x128xf32, #tpu.memory_space<vmem>>, vector<128x128xf32>
    %cst_19 = arith.constant 5.000000e-01 : f32
    %20 = vector.broadcast %cst_19 : f32 to vector<128x128xf32>
    %21 = arith.mulf %20, %19 : vector<128x128xf32>
    %22 = arith.addf %18, %21 : vector<128x128xf32>
    %cst_20 = arith.constant 0.000000e+00 : f32
    %23 = vector.broadcast %cst_20 : f32 to vector<128x128xf32>
    %24 = arith.maximumf %22, %23 : vector<128x128xf32>
    %c3_i32 = arith.constant 3 : i32
    %c0_21 = arith.constant 0 : index
    %c0_22 = arith.constant 0 : index
    %25 = vector.load %arg1[%c0_21, %c0_22] : memref<128x128xf32, #tpu.memory_space<vmem>>, vector<128x128xf32>
    %cst_23 = arith.constant dense<0.000000e+00> : vector<128x128xf32>
    %26 = tpu.matmul %25, %24, %cst_23 {dimension_numbers = #tpu.dot_dimension_numbers<[1], [0], [0], [1], [0, 0, 1, 1], [], []>} : vector<128x128xf32>, vector<128x128xf32>, vector<128x128xf32> -> vector<128x128xf32>
    %c0_24 = arith.constant 0 : index
    %c0_25 = arith.constant 0 : index
    %27 = vector.load %arg2[%c0_24, %c0_25] : memref<128x128xf32, #tpu.memory_space<vmem>>, vector<128x128xf32>
    %cst_26 = arith.constant 5.000000e-01 : f32
    %28 = vector.broadcast %cst_26 : f32 to vector<128x128xf32>
    %29 = arith.mulf %28, %27 : vector<128x128xf32>
    %30 = arith.addf %26, %29 : vector<128x128xf32>
    %cst_27 = arith.constant 0.000000e+00 : f32
    %31 = vector.broadcast %cst_27 : f32 to vector<128x128xf32>
    %32 = arith.maximumf %30, %31 : vector<128x128xf32>
    %c0_28 = arith.constant 0 : index
    %c0_29 = arith.constant 0 : index
    %33 = vector.load %arg3[%c0_28, %c0_29] : memref<128x128xf32, #tpu.memory_space<vmem>>, vector<128x128xf32>
    tpu.vector_store %arg3[%c0_28, %c0_29], %32 {strides = array<i32>} : memref<128x128xf32, #tpu.memory_space<vmem>>, vector<128x128xf32>,
    return
  }
  func.func @transform_0(%arg0: i32) -> (i32, i32) {
    %c0_i32 = arith.constant 0 : i32
    %c0_i32_0 = arith.constant 0 : i32
    %c0_i32_1 = arith.constant 0 : i32
    return %c0_i32, %c0_i32_0 : i32, i32
  }
  func.func @transform_1(%arg0: i32) -> (i32, i32) {
    %c0_i32 = arith.constant 0 : i32
    %c0_i32_0 = arith.constant 0 : i32
    return %c0_i32, %arg0 : i32, i32
  }
  func.func @transform_2(%arg0: i32) -> (i32, i32) {
    %c0_i32 = arith.constant 0 : i32
    %c0_i32_0 = arith.constant 0 : i32
    return %c0_i32, %arg0 : i32, i32
  }
}

</mosaic_0001>

<llo_original>
// kernel: unfolding_and_attention_forward.1
$region0: #{unfolding_and_attention_forward.1}
  #allocation0 [shape = 'u32[]', space=smem, size = 0x4, offset = 0x4, fixed_abs, tag = 'smem constant byte address 0x4 - core index']
  #allocation1 [shape = 'u32[144,128]{1,0:T(1,128)}', space=vmem, size = 0x12000, scoped, tag = 'internal scratch']
  %s0 = inlined_call_operand.vmem [shape: f32[128,128], index: 0, kind: input, shape index: {}]
  %s1 = inlined_call_operand.vmem [shape: f32[128,128], index: 1, kind: input, shape index: {}]
  %s2 = inlined_call_operand.vmem [shape: f32[128,128], index: 2, kind: output, shape index: {}]
  %s3 = sld [smem:[#allocation0]]
  $region18: #{unfolding_and_attention_forward.1} parent=0
    _
  %s5 = ssub.s32 1, %s3
  %s6 = scalar_select 0, %s5, %s3
  // Predicated region
  $region2: #{unfolding_and_attention_forward.1} parent=0 // pred_check
    _
  $region3: #{unfolding_and_attention_forward.1} parent=0 // pred_check_branch
    %8 = sbr.rel (0) target = $region5
  $region4: #{unfolding_and_attention_forward.1} parent=0 // pred_region
    _
  $region5: #{unfolding_and_attention_forward.1} parent=0 // pred_fallthru
    _
  // Predicated region
  $region6: #{unfolding_and_attention_forward.1} parent=0 // pred_check
    _
  $region7: #{unfolding_and_attention_forward.1} parent=0 // pred_check_branch
    %10 = sbr.rel (0) target = $region9
  $region8: #{unfolding_and_attention_forward.1} parent=0 // pred_region
    _
  $region9: #{unfolding_and_attention_forward.1} parent=0 // pred_fallthru
    _
  %v11 = vld [vmem:[%s1] sm:$0xff]
  %v12 = vld [vmem:[%s1 + $0x8] sm:$0xff]
  %v13 = vld [vmem:[%s1 + $0x10] sm:$0xff]
  %v14 = vld [vmem:[%s1 + $0x18] sm:$0xff]
  %v15 = vld [vmem:[%s1 + $0x20] sm:$0xff]
  %v16 = vld [vmem:[%s1 + $0x28] sm:$0xff]
  %v17 = vld [vmem:[%s1 + $0x30] sm:$0xff]
  %v18 = vld [vmem:[%s1 + $0x38] sm:$0xff]
  %v19 = vld [vmem:[%s1 + $0x40] sm:$0xff]
  %v20 = vld [vmem:[%s1 + $0x48] sm:$0xff]
  %v21 = vld [vmem:[%s1 + $0x50] sm:$0xff]
  %v22 = vld [vmem:[%s1 + $0x58] sm:$0xff]
  %v23 = vld [vmem:[%s1 + $0x60] sm:$0xff]
  %v24 = vld [vmem:[%s1 + $0x68] sm:$0xff]
  %v25 = vld [vmem:[%s1 + $0x70] sm:$0xff]
  %v26 = vld [vmem:[%s1 + $0x78] sm:$0xff]
  %v27 = vld [vmem:[%s0] sm:$0xff]
  %v28 = vld [vmem:[%s0 + $0x8] sm:$0xff]
  %v29 = vld [vmem:[%s0 + $0x10] sm:$0xff]
  %v30 = vld [vmem:[%s0 + $0x18] sm:$0xff]
  %v31 = vld [vmem:[%s0 + $0x20] sm:$0xff]
  %v32 = vld [vmem:[%s0 + $0x28] sm:$0xff]
  %v33 = vld [vmem:[%s0 + $0x30] sm:$0xff]
  %v34 = vld [vmem:[%s0 + $0x38] sm:$0xff]
  %v35 = vld [vmem:[%s0 + $0x40] sm:$0xff]
  %v36 = vld [vmem:[%s0 + $0x48] sm:$0xff]
  %v37 = vld [vmem:[%s0 + $0x50] sm:$0xff]
  %v38 = vld [vmem:[%s0 + $0x58] sm:$0xff]
  %v39 = vld [vmem:[%s0 + $0x60] sm:$0xff]
  %v40 = vld [vmem:[%s0 + $0x68] sm:$0xff]
  %v41 = vld [vmem:[%s0 + $0x70] sm:$0xff]
  %v42 = vld [vmem:[%s0 + $0x78] sm:$0xff]
  %v43 = vmul.f32 %v11, 0.5
  %v44 = vmul.f32 %v12, 0.5
  %v45 = vmul.f32 %v13, 0.5
  %v46 = vmul.f32 %v14, 0.5
  %v47 = vmul.f32 %v15, 0.5
  %v48 = vmul.f32 %v16, 0.5
  %v49 = vmul.f32 %v17, 0.5
  %v50 = vmul.f32 %v18, 0.5
  %v51 = vmul.f32 %v19, 0.5
  %v52 = vmul.f32 %v20, 0.5
  %v53 = vmul.f32 %v21, 0.5
  %v54 = vmul.f32 %v22, 0.5
  %v55 = vmul.f32 %v23, 0.5
  %v56 = vmul.f32 %v24, 0.5
  %v57 = vmul.f32 %v25, 0.5
  %v58 = vmul.f32 %v26, 0.5
  %59 = vmatprep.subr.mxu0 0.0
  %60 = vmatpush1.msra.mxu0 %v11
  %61 = vmatprep.subr.mxu0 0.0
  %62 = vmatpush1.msra.mxu0 %v12
  %63 = vmatprep.subr.mxu0 0.0
  %64 = vmatpush1.msra.mxu0 %v13
  %65 = vmatprep.subr.mxu0 0.0
  %66 = vmatpush1.msra.mxu0 %v14
  %67 = vmatprep.subr.mxu0 0.0
  %68 = vmatpush1.msra.mxu0 %v15
  %69 = vmatprep.subr.mxu0 0.0
  %70 = vmatpush1.msra.mxu0 %v16
  %71 = vmatprep.subr.mxu0 0.0
  %72 = vmatpush1.msra.mxu0 %v17
  %73 = vmatprep.subr.mxu0 0.0
  %74 = vmatpush1.msra.mxu0 %v18
  %75 = vmatprep.subr.mxu0 0.0
  %76 = vmatpush1.msra.mxu0 %v19
  %77 = vmatprep.subr.mxu0 0.0
  %78 = vmatpush1.msra.mxu0 %v20
  %79 = vmatprep.subr.mxu0 0.0
  %80 = vmatpush1.msra.mxu0 %v21
  %81 = vmatprep.subr.mxu0 0.0
  %82 = vmatpush1.msra.mxu0 %v22
  %83 = vmatprep.subr.mxu0 0.0
  %84 = vmatpush1.msra.mxu0 %v23
  %85 = vmatprep.subr.mxu0 0.0
  %86 = vmatpush1.msra.mxu0 %v24
  %87 = vmatprep.subr.mxu0 0.0
  %88 = vmatpush1.msra.mxu0 %v25
  %89 = vmatprep.subr.mxu0 0.0
  %90 = vmatpush1.msra.mxu0 %v26
  %91 = vmatprep.subr.mxu0 0.0
  %92 = vmatpush1.msra.mxu0 0.0
  %93 = vmatprep.subr.mxu0 0.0
  %94 = vmatpush1.msra.mxu0 0.0
  %95 = vmatprep.subr.mxu0 0.0
  %96 = vmatpush1.msra.mxu0 0.0
  %97 = vmatprep.subr.mxu0 0.0
  %98 = vmatpush1.msra.mxu0 0.0
  %99 = vmatprep.subr.mxu0 0.0
  %100 = vmatpush1.msra.mxu0 0.0
  %101 = vmatprep.subr.mxu0 0.0
  %102 = vmatpush1.msra.mxu0 0.0
  %103 = vmatprep.subr.mxu0 0.0
  %104 = vmatpush1.msra.mxu0 0.0
  %105 = vmatprep.subr.mxu0 0.0
  %106 = vmatpush1.msra.mxu0 0.0
  %107 = vmatprep.subr.mxu0 0.0
  %108 = vmatpush1.msra.mxu0 0.0
  %109 = vmatprep.subr.mxu0 0.0
  %110 = vmatpush1.msra.mxu0 0.0
  %111 = vmatprep.subr.mxu0 0.0
  %112 = vmatpush1.msra.mxu0 0.0
  %113 = vmatprep.subr.mxu0 0.0
  %114 = vmatpush1.msra.mxu0 0.0
  %115 = vmatprep.subr.mxu0 0.0
  %116 = vmatpush1.msra.mxu0 0.0
  %117 = vmatprep.subr.mxu0 0.0
  %118 = vmatpush1.msra.mxu0 0.0
  %119 = vmatprep.subr.mxu0 0.0
  %120 = vmatpush1.msra.mxu0 0.0
  %121 = vmatprep.subr.mxu0 0.0
  %122 = vmatpush1.msra.mxu0 0.0
  %123 = vmatprep.mubr.f32.mxu0 0.0
  %124 = vmatmul.mubr.f32.gmra.mrb[0].mxu0 %v27
  %v125 = vpop.f32.mrb[0].mxu0
  %v126 = vadd.f32 %v43, %v125
  %v127 = vpop.f32.mrb[0].mxu0
  %128 = vmatprep.mubr.f32.mxu0 0.0
  %129 = vmatmul.mubr.f32.gmra.mrb[0].mxu0 %v28
  %v130 = vpop.f32.mrb[0].mxu0
  %v131 = vadd.f32 %v44, %v130
  %v132 = vpop.f32.mrb[0].mxu0
  %133 = vmatprep.mubr.f32.mxu0 0.0
  %134 = vmatmul.mubr.f32.gmra.mrb[0].mxu0 %v29
  %v135 = vpop.f32.mrb[0].mxu0
  %v136 = vadd.f32 %v45, %v135
  %v137 = vpop.f32.mrb[0].mxu0
  %138 = vmatprep.mubr.f32.mxu0 0.0
  %139 = vmatmul.mubr.f32.gmra.mrb[0].mxu0 %v30
  %v140 = vpop.f32.mrb[0].mxu0
  %v141 = vadd.f32 %v46, %v140
  %v142 = vpop.f32.mrb[0].mxu0
  %143 = vmatprep.mubr.f32.mxu0 0.0
  %144 = vmatmul.mubr.f32.gmra.mrb[0].mxu0 %v31
  %v145 = vpop.f32.mrb[0].mxu0
  %v146 = vadd.f32 %v47, %v145
  %v147 = vpop.f32.mrb[0].mxu0
  %148 = vmatprep.mubr.f32.mxu0 0.0
  %149 = vmatmul.mubr.f32.gmra.mrb[0].mxu0 %v32
  %v150 = vpop.f32.mrb[0].mxu0
  %v151 = vadd.f32 %v48, %v150
  %v152 = vpop.f32.mrb[0].mxu0
  %153 = vmatprep.mubr.f32.mxu0 0.0
  %154 = vmatmul.mubr.f32.gmra.mrb[0].mxu0 %v33
  %v155 = vpop.f32.mrb[0].mxu0
  %v156 = vadd.f32 %v49, %v155
  %v157 = vpop.f32.mrb[0].mxu0
  %158 = vmatprep.mubr.f32.mxu0 0.0
  %159 = vmatmul.mubr.f32.gmra.mrb[0].mxu0 %v34
  %v160 = vpop.f32.mrb[0].mxu0
  %v161 = vadd.f32 %v50, %v160
  %v162 = vpop.f32.mrb[0].mxu0
  %163 = vmatprep.mubr.f32.mxu0 0.0
  %164 = vmatmul.mubr.f32.gmra.mrb[0].mxu0 %v35
  %v165 = vpop.f32.mrb[0].mxu0
  %v166 = vadd.f32 %v51, %v165
  %v167 = vpop.f32.mrb[0].mxu0
  %168 = vmatprep.mubr.f32.mxu0 0.0
  %169 = vmatmul.mubr.f32.gmra.mrb[0].mxu0 %v36
  %v170 = vpop.f32.mrb[0].mxu0
  %v171 = vadd.f32 %v52, %v170
  %v172 = vpop.f32.mrb[0].mxu0
  %173 = vmatprep.mubr.f32.mxu0 0.0
  %174 = vmatmul.mubr.f32.gmra.mrb[0].mxu0 %v37
  %v175 = vpop.f32.mrb[0].mxu0
  %v176 = vadd.f32 %v53, %v175
  %v177 = vpop.f32.mrb[0].mxu0
  %178 = vmatprep.mubr.f32.mxu0 0.0
  %179 = vmatmul.mubr.f32.gmra.mrb[0].mxu0 %v38
  %v180 = vpop.f32.mrb[0].mxu0
  %v181 = vadd.f32 %v54, %v180
  %v182 = vpop.f32.mrb[0].mxu0
  %183 = vmatprep.mubr.f32.mxu0 0.0
  %184 = vmatmul.mubr.f32.gmra.mrb[0].mxu0 %v39
  %v185 = vpop.f32.mrb[0].mxu0
  %v186 = vadd.f32 %v55, %v185
  %v187 = vpop.f32.mrb[0].mxu0
  %188 = vmatprep.mubr.f32.mxu0 0.0
  %189 = vmatmul.mubr.f32.gmra.mrb[0].mxu0 %v40
  %v190 = vpop.f32.mrb[0].mxu0
  %v191 = vadd.f32 %v56, %v190
  %v192 = vpop.f32.mrb[0].mxu0
  %193 = vmatprep.mubr.f32.mxu0 0.0
  %194 = vmatmul.mubr.f32.gmra.mrb[0].mxu0 %v41
  %v195 = vpop.f32.mrb[0].mxu0
  %v196 = vadd.f32 %v57, %v195
  %v197 = vpop.f32.mrb[0].mxu0
  %198 = vmatprep.mubr.f32.mxu0 0.0
  %199 = vmatmul.mubr.f32.gmra.mrb[0].mxu0 %v42
  %v200 = vpop.f32.mrb[0].mxu0
  %v201 = vadd.f32 %v58, %v200
  %v202 = vpop.f32.mrb[0].mxu0
  %203 = vdwg.mxu0
  %v204 = vmax.f32 %v126, 0.0
  %v205 = vmax.f32 %v131, 0.0
  %v206 = vmax.f32 %v136, 0.0
  %v207 = vmax.f32 %v141, 0.0
  %v208 = vmax.f32 %v146, 0.0
  %v209 = vmax.f32 %v151, 0.0
  %v210 = vmax.f32 %v156, 0.0
  %v211 = vmax.f32 %v161, 0.0
  %v212 = vmax.f32 %v166, 0.0
  %v213 = vmax.f32 %v171, 0.0
  %v214 = vmax.f32 %v176, 0.0
  %v215 = vmax.f32 %v181, 0.0
  %v216 = vmax.f32 %v186, 0.0
  %v217 = vmax.f32 %v191, 0.0
  %v218 = vmax.f32 %v196, 0.0
  %v219 = vmax.f32 %v201, 0.0
  %220 = vmatprep.subr.mxu0 0.0
  %221 = vmatpush1.msra.mxu0 %v204
  %222 = vmatprep.subr.mxu0 0.0
  %223 = vmatpush1.msra.mxu0 %v205
  %224 = vmatprep.subr.mxu0 0.0
  %225 = vmatpush1.msra.mxu0 %v206
  %226 = vmatprep.subr.mxu0 0.0
  %227 = vmatpush1.msra.mxu0 %v207
  %228 = vmatprep.subr.mxu0 0.0
  %229 = vmatpush1.msra.mxu0 %v208
  %230 = vmatprep.subr.mxu0 0.0
  %231 = vmatpush1.msra.mxu0 %v209
  %232 = vmatprep.subr.mxu0 0.0
  %233 = vmatpush1.msra.mxu0 %v210
  %234 = vmatprep.subr.mxu0 0.0
  %235 = vmatpush1.msra.mxu0 %v211
  %236 = vmatprep.subr.mxu0 0.0
  %237 = vmatpush1.msra.mxu0 %v212
  %238 = vmatprep.subr.mxu0 0.0
  %239 = vmatpush1.msra.mxu0 %v213
  %240 = vmatprep.subr.mxu0 0.0
  %241 = vmatpush1.msra.mxu0 %v214
  %242 = vmatprep.subr.mxu0 0.0
  %243 = vmatpush1.msra.mxu0 %v215
  %244 = vmatprep.subr.mxu0 0.0
  %245 = vmatpush1.msra.mxu0 %v216
  %246 = vmatprep.subr.mxu0 0.0
  %247 = vmatpush1.msra.mxu0 %v217
  %248 = vmatprep.subr.mxu0 0.0
  %249 = vmatpush1.msra.mxu0 %v218
  %250 = vmatprep.subr.mxu0 0.0
  %251 = vmatpush1.msra.mxu0 %v219
  %252 = vmatprep.subr.mxu0 0.0
  %253 = vmatpush1.msra.mxu0 0.0
  %254 = vmatprep.subr.mxu0 0.0
  %255 = vmatpush1.msra.mxu0 0.0
  %256 = vmatprep.subr.mxu0 0.0
  %257 = vmatpush1.msra.mxu0 0.0
  %258 = vmatprep.subr.mxu0 0.0
  %259 = vmatpush1.msra.mxu0 0.0
  %260 = vmatprep.subr.mxu0 0.0
  %261 = vmatpush1.msra.mxu0 0.0
  %262 = vmatprep.subr.mxu0 0.0
  %263 = vmatpush1.msra.mxu0 0.0
  %264 = vmatprep.subr.mxu0 0.0
  %265 = vmatpush1.msra.mxu0 0.0
  %266 = vmatprep.subr.mxu0 0.0
  %267 = vmatpush1.msra.mxu0 0.0
  %268 = vmatprep.subr.mxu0 0.0
  %269 = vmatpush1.msra.mxu0 0.0
  %270 = vmatprep.subr.mxu0 0.0
  %271 = vmatpush1.msra.mxu0 0.0
  %272 = vmatprep.subr.mxu0 0.0
  %273 = vmatpush1.msra.mxu0 0.0
  %274 = vmatprep.subr.mxu0 0.0
  %275 = vmatpush1.msra.mxu0 0.0
  %276 = vmatprep.subr.mxu0 0.0
  %277 = vmatpush1.msra.mxu0 0.0
  %278 = vmatprep.subr.mxu0 0.0
  %279 = vmatpush1.msra.mxu0 0.0
  %280 = vmatprep.subr.mxu0 0.0
  %281 = vmatpush1.msra.mxu0 0.0
  %282 = vmatprep.subr.mxu0 0.0
  %283 = vmatpush1.msra.mxu0 0.0
  %284 = vmatprep.mubr.f32.mxu0 0.0
  %285 = vmatmul.mubr.f32.gmra.mrb[0].mxu0 %v27
  %v286 = vpop.f32.mrb[0].mxu0
  %v287 = vadd.f32 %v43, %v286
  %v288 = vpop.f32.mrb[0].mxu0
  %289 = vmatprep.mubr.f32.mxu0 0.0
  %290 = vmatmul.mubr.f32.gmra.mrb[0].mxu0 %v28
  %v291 = vpop.f32.mrb[0].mxu0
  %v292 = vadd.f32 %v44, %v291
  %v293 = vpop.f32.mrb[0].mxu0
  %294 = vmatprep.mubr.f32.mxu0 0.0
  %295 = vmatmul.mubr.f32.gmra.mrb[0].mxu0 %v29
  %v296 = vpop.f32.mrb[0].mxu0
  %v297 = vadd.f32 %v45, %v296
  %v298 = vpop.f32.mrb[0].mxu0
  %299 = vmatprep.mubr.f32.mxu0 0.0
  %300 = vmatmul.mubr.f32.gmra.mrb[0].mxu0 %v30
  %v301 = vpop.f32.mrb[0].mxu0
  %v302 = vadd.f32 %v46, %v301
  %v303 = vpop.f32.mrb[0].mxu0
  %304 = vmatprep.mubr.f32.mxu0 0.0
  %305 = vmatmul.mubr.f32.gmra.mrb[0].mxu0 %v31
  %v306 = vpop.f32.mrb[0].mxu0
  %v307 = vadd.f32 %v47, %v306
  %v308 = vpop.f32.mrb[0].mxu0
  %309 = vmatprep.mubr.f32.mxu0 0.0
  %310 = vmatmul.mubr.f32.gmra.mrb[0].mxu0 %v32
  %v311 = vpop.f32.mrb[0].mxu0
  %v312 = vadd.f32 %v48, %v311
  %v313 = vpop.f32.mrb[0].mxu0
  %314 = vmatprep.mubr.f32.mxu0 0.0
  %315 = vmatmul.mubr.f32.gmra.mrb[0].mxu0 %v33
  %v316 = vpop.f32.mrb[0].mxu0
  %v317 = vadd.f32 %v49, %v316
  %v318 = vpop.f32.mrb[0].mxu0
  %319 = vmatprep.mubr.f32.mxu0 0.0
  %320 = vmatmul.mubr.f32.gmra.mrb[0].mxu0 %v34
  %v321 = vpop.f32.mrb[0].mxu0
  %v322 = vadd.f32 %v50, %v321
  %v323 = vpop.f32.mrb[0].mxu0
  %324 = vmatprep.mubr.f32.mxu0 0.0
  %325 = vmatmul.mubr.f32.gmra.mrb[0].mxu0 %v35
  %v326 = vpop.f32.mrb[0].mxu0
  %v327 = vadd.f32 %v51, %v326
  %v328 = vpop.f32.mrb[0].mxu0
  %329 = vmatprep.mubr.f32.mxu0 0.0
  %330 = vmatmul.mubr.f32.gmra.mrb[0].mxu0 %v36
  %v331 = vpop.f32.mrb[0].mxu0
  %v332 = vadd.f32 %v52, %v331
  %v333 = vpop.f32.mrb[0].mxu0
  %334 = vmatprep.mubr.f32.mxu0 0.0
  %335 = vmatmul.mubr.f32.gmra.mrb[0].mxu0 %v37
  %v336 = vpop.f32.mrb[0].mxu0
  %v337 = vadd.f32 %v53, %v336
  %v338 = vpop.f32.mrb[0].mxu0
  %339 = vmatprep.mubr.f32.mxu0 0.0
  %340 = vmatmul.mubr.f32.gmra.mrb[0].mxu0 %v38
  %v341 = vpop.f32.mrb[0].mxu0
  %v342 = vadd.f32 %v54, %v341
  %v343 = vpop.f32.mrb[0].mxu0
  %344 = vmatprep.mubr.f32.mxu0 0.0
  %345 = vmatmul.mubr.f32.gmra.mrb[0].mxu0 %v39
  %v346 = vpop.f32.mrb[0].mxu0
  %v347 = vadd.f32 %v55, %v346
  %v348 = vpop.f32.mrb[0].mxu0
  %349 = vmatprep.mubr.f32.mxu0 0.0
  %350 = vmatmul.mubr.f32.gmra.mrb[0].mxu0 %v40
  %v351 = vpop.f32.mrb[0].mxu0
  %v352 = vadd.f32 %v56, %v351
  %v353 = vpop.f32.mrb[0].mxu0
  %354 = vmatprep.mubr.f32.mxu0 0.0
  %355 = vmatmul.mubr.f32.gmra.mrb[0].mxu0 %v41
  %v356 = vpop.f32.mrb[0].mxu0
  %v357 = vadd.f32 %v57, %v356
  %v358 = vpop.f32.mrb[0].mxu0
  %359 = vmatprep.mubr.f32.mxu0 0.0
  %360 = vmatmul.mubr.f32.gmra.mrb[0].mxu0 %v42
  %v361 = vpop.f32.mrb[0].mxu0
  %v362 = vadd.f32 %v58, %v361
  %v363 = vpop.f32.mrb[0].mxu0
  %364 = vdwg.mxu0
  %v365 = vmax.f32 %v287, 0.0
  %v366 = vmax.f32 %v292, 0.0
  %v367 = vmax.f32 %v297, 0.0
  %v368 = vmax.f32 %v302, 0.0
  %v369 = vmax.f32 %v307, 0.0
  %v370 = vmax.f32 %v312, 0.0
  %v371 = vmax.f32 %v317, 0.0
  %v372 = vmax.f32 %v322, 0.0
  %v373 = vmax.f32 %v327, 0.0
  %v374 = vmax.f32 %v332, 0.0
  %v375 = vmax.f32 %v337, 0.0
  %v376 = vmax.f32 %v342, 0.0
  %v377 = vmax.f32 %v347, 0.0
  %v378 = vmax.f32 %v352, 0.0
  %v379 = vmax.f32 %v357, 0.0
  %v380 = vmax.f32 %v362, 0.0
  %381 = vmatprep.subr.mxu0 0.0
  %382 = vmatpush1.msra.mxu0 %v365
  %383 = vmatprep.subr.mxu0 0.0
  %384 = vmatpush1.msra.mxu0 %v366
  %385 = vmatprep.subr.mxu0 0.0
  %386 = vmatpush1.msra.mxu0 %v367
  %387 = vmatprep.subr.mxu0 0.0
  %388 = vmatpush1.msra.mxu0 %v368
  %389 = vmatprep.subr.mxu0 0.0
  %390 = vmatpush1.msra.mxu0 %v369
  %391 = vmatprep.subr.mxu0 0.0
  %392 = vmatpush1.msra.mxu0 %v370
  %393 = vmatprep.subr.mxu0 0.0
  %394 = vmatpush1.msra.mxu0 %v371
  %395 = vmatprep.subr.mxu0 0.0
  %396 = vmatpush1.msra.mxu0 %v372
  %397 = vmatprep.subr.mxu0 0.0
  %398 = vmatpush1.msra.mxu0 %v373
  %399 = vmatprep.subr.mxu0 0.0
  %400 = vmatpush1.msra.mxu0 %v374
  %401 = vmatprep.subr.mxu0 0.0
  %402 = vmatpush1.msra.mxu0 %v375
  %403 = vmatprep.subr.mxu0 0.0
  %404 = vmatpush1.msra.mxu0 %v376
  %405 = vmatprep.subr.mxu0 0.0
  %406 = vmatpush1.msra.mxu0 %v377
  %407 = vmatprep.subr.mxu0 0.0
  %408 = vmatpush1.msra.mxu0 %v378
  %409 = vmatprep.subr.mxu0 0.0
  %410 = vmatpush1.msra.mxu0 %v379
  %411 = vmatprep.subr.mxu0 0.0
  %412 = vmatpush1.msra.mxu0 %v380
  %413 = vmatprep.subr.mxu0 0.0
  %414 = vmatpush1.msra.mxu0 0.0
  %415 = vmatprep.subr.mxu0 0.0
  %416 = vmatpush1.msra.mxu0 0.0
  %417 = vmatprep.subr.mxu0 0.0
  %418 = vmatpush1.msra.mxu0 0.0
  %419 = vmatprep.subr.mxu0 0.0
  %420 = vmatpush1.msra.mxu0 0.0
  %421 = vmatprep.subr.mxu0 0.0
  %422 = vmatpush1.msra.mxu0 0.0
  %423 = vmatprep.subr.mxu0 0.0
  %424 = vmatpush1.msra.mxu0 0.0
  %425 = vmatprep.subr.mxu0 0.0
  %426 = vmatpush1.msra.mxu0 0.0
  %427 = vmatprep.subr.mxu0 0.0
  %428 = vmatpush1.msra.mxu0 0.0
  %429 = vmatprep.subr.mxu0 0.0
  %430 = vmatpush1.msra.mxu0 0.0
  %431 = vmatprep.subr.mxu0 0.0
  %432 = vmatpush1.msra.mxu0 0.0
  %433 = vmatprep.subr.mxu0 0.0
  %434 = vmatpush1.msra.mxu0 0.0
  %435 = vmatprep.subr.mxu0 0.0
  %436 = vmatpush1.msra.mxu0 0.0
  %437 = vmatprep.subr.mxu0 0.0
  %438 = vmatpush1.msra.mxu0 0.0
  %439 = vmatprep.subr.mxu0 0.0
  %440 = vmatpush1.msra.mxu0 0.0
  %441 = vmatprep.subr.mxu0 0.0
  %442 = vmatpush1.msra.mxu0 0.0
  %443 = vmatprep.subr.mxu0 0.0
  %444 = vmatpush1.msra.mxu0 0.0
  %445 = vmatprep.mubr.f32.mxu0 0.0
  %446 = vmatmul.mubr.f32.gmra.mrb[0].mxu0 %v27
  %v447 = vpop.f32.mrb[0].mxu0
  %v448 = vadd.f32 %v43, %v447
  %v449 = vpop.f32.mrb[0].mxu0
  %450 = vmatprep.mubr.f32.mxu0 0.0
  %451 = vmatmul.mubr.f32.gmra.mrb[0].mxu0 %v28
  %v452 = vpop.f32.mrb[0].mxu0
  %v453 = vadd.f32 %v44, %v452
  %v454 = vpop.f32.mrb[0].mxu0
  %455 = vmatprep.mubr.f32.mxu0 0.0
  %456 = vmatmul.mubr.f32.gmra.mrb[0].mxu0 %v29
  %v457 = vpop.f32.mrb[0].mxu0
  %v458 = vadd.f32 %v45, %v457
  %v459 = vpop.f32.mrb[0].mxu0
  %460 = vmatprep.mubr.f32.mxu0 0.0
  %461 = vmatmul.mubr.f32.gmra.mrb[0].mxu0 %v30
  %v462 = vpop.f32.mrb[0].mxu0
  %v463 = vadd.f32 %v46, %v462
  %v464 = vpop.f32.mrb[0].mxu0
  %465 = vmatprep.mubr.f32.mxu0 0.0
  %466 = vmatmul.mubr.f32.gmra.mrb[0].mxu0 %v31
  %v467 = vpop.f32.mrb[0].mxu0
  %v468 = vadd.f32 %v47, %v467
  %v469 = vpop.f32.mrb[0].mxu0
  %470 = vmatprep.mubr.f32.mxu0 0.0
  %471 = vmatmul.mubr.f32.gmra.mrb[0].mxu0 %v32
  %v472 = vpop.f32.mrb[0].mxu0
  %v473 = vadd.f32 %v48, %v472
  %v474 = vpop.f32.mrb[0].mxu0
  %475 = vmatprep.mubr.f32.mxu0 0.0
  %476 = vmatmul.mubr.f32.gmra.mrb[0].mxu0 %v33
  %v477 = vpop.f32.mrb[0].mxu0
  %v478 = vadd.f32 %v49, %v477
  %v479 = vpop.f32.mrb[0].mxu0
  %480 = vmatprep.mubr.f32.mxu0 0.0
  %481 = vmatmul.mubr.f32.gmra.mrb[0].mxu0 %v34
  %v482 = vpop.f32.mrb[0].mxu0
  %v483 = vadd.f32 %v50, %v482
  %v484 = vpop.f32.mrb[0].mxu0
  %485 = vmatprep.mubr.f32.mxu0 0.0
  %486 = vmatmul.mubr.f32.gmra.mrb[0].mxu0 %v35
  %v487 = vpop.f32.mrb[0].mxu0
  %v488 = vadd.f32 %v51, %v487
  %v489 = vpop.f32.mrb[0].mxu0
  %490 = vmatprep.mubr.f32.mxu0 0.0
  %491 = vmatmul.mubr.f32.gmra.mrb[0].mxu0 %v36
  %v492 = vpop.f32.mrb[0].mxu0
  %v493 = vadd.f32 %v52, %v492
  %v494 = vpop.f32.mrb[0].mxu0
  %495 = vmatprep.mubr.f32.mxu0 0.0
  %496 = vmatmul.mubr.f32.gmra.mrb[0].mxu0 %v37
  %v497 = vpop.f32.mrb[0].mxu0
  %v498 = vadd.f32 %v53, %v497
  %v499 = vpop.f32.mrb[0].mxu0
  %500 = vmatprep.mubr.f32.mxu0 0.0
  %501 = vmatmul.mubr.f32.gmra.mrb[0].mxu0 %v38
  %v502 = vpop.f32.mrb[0].mxu0
  %v503 = vadd.f32 %v54, %v502
  %v504 = vpop.f32.mrb[0].mxu0
  %505 = vmatprep.mubr.f32.mxu0 0.0
  %506 = vmatmul.mubr.f32.gmra.mrb[0].mxu0 %v39
  %v507 = vpop.f32.mrb[0].mxu0
  %v508 = vadd.f32 %v55, %v507
  %v509 = vpop.f32.mrb[0].mxu0
  %510 = vmatprep.mubr.f32.mxu0 0.0
  %511 = vmatmul.mubr.f32.gmra.mrb[0].mxu0 %v40
  %v512 = vpop.f32.mrb[0].mxu0
  %v513 = vadd.f32 %v56, %v512
  %v514 = vpop.f32.mrb[0].mxu0
  %515 = vmatprep.mubr.f32.mxu0 0.0
  %516 = vmatmul.mubr.f32.gmra.mrb[0].mxu0 %v41
  %v517 = vpop.f32.mrb[0].mxu0
  %v518 = vadd.f32 %v57, %v517
  %v519 = vpop.f32.mrb[0].mxu0
  %520 = vmatprep.mubr.f32.mxu0 0.0
  %521 = vmatmul.mubr.f32.gmra.mrb[0].mxu0 %v42
  %v522 = vpop.f32.mrb[0].mxu0
  %v523 = vadd.f32 %v58, %v522
  %v524 = vpop.f32.mrb[0].mxu0
  %525 = vdwg.mxu0
  %v526 = vmax.f32 %v448, 0.0
  %v527 = vmax.f32 %v453, 0.0
  %v528 = vmax.f32 %v458, 0.0
  %v529 = vmax.f32 %v463, 0.0
  %v530 = vmax.f32 %v468, 0.0
  %v531 = vmax.f32 %v473, 0.0
  %v532 = vmax.f32 %v478, 0.0
  %v533 = vmax.f32 %v483, 0.0
  %v534 = vmax.f32 %v488, 0.0
  %v535 = vmax.f32 %v493, 0.0
  %v536 = vmax.f32 %v498, 0.0
  %v537 = vmax.f32 %v503, 0.0
  %v538 = vmax.f32 %v508, 0.0
  %v539 = vmax.f32 %v513, 0.0
  %v540 = vmax.f32 %v518, 0.0
  %v541 = vmax.f32 %v523, 0.0
  %542 = vmatprep.subr.mxu0 0.0
  %543 = vmatpush1.msra.mxu0 %v526
  %544 = vmatprep.subr.mxu0 0.0
  %545 = vmatpush1.msra.mxu0 %v527
  %546 = vmatprep.subr.mxu0 0.0
  %547 = vmatpush1.msra.mxu0 %v528
  %548 = vmatprep.subr.mxu0 0.0
  %549 = vmatpush1.msra.mxu0 %v529
  %550 = vmatprep.subr.mxu0 0.0
  %551 = vmatpush1.msra.mxu0 %v530
  %552 = vmatprep.subr.mxu0 0.0
  %553 = vmatpush1.msra.mxu0 %v531
  %554 = vmatprep.subr.mxu0 0.0
  %555 = vmatpush1.msra.mxu0 %v532
  %556 = vmatprep.subr.mxu0 0.0
  %557 = vmatpush1.msra.mxu0 %v533
  %558 = vmatprep.subr.mxu0 0.0
  %559 = vmatpush1.msra.mxu0 %v534
  %560 = vmatprep.subr.mxu0 0.0
  %561 = vmatpush1.msra.mxu0 %v535
  %562 = vmatprep.subr.mxu0 0.0
  %563 = vmatpush1.msra.mxu0 %v536
  %564 = vmatprep.subr.mxu0 0.0
  %565 = vmatpush1.msra.mxu0 %v537
  %566 = vmatprep.subr.mxu0 0.0
  %567 = vmatpush1.msra.mxu0 %v538
  %568 = vmatprep.subr.mxu0 0.0
  %569 = vmatpush1.msra.mxu0 %v539
  %570 = vmatprep.subr.mxu0 0.0
  %571 = vmatpush1.msra.mxu0 %v540
  %572 = vmatprep.subr.mxu0 0.0
  %573 = vmatpush1.msra.mxu0 %v541
  %574 = vmatprep.subr.mxu0 0.0
  %575 = vmatpush1.msra.mxu0 0.0
  %576 = vmatprep.subr.mxu0 0.0
  %577 = vmatpush1.msra.mxu0 0.0
  %578 = vmatprep.subr.mxu0 0.0
  %579 = vmatpush1.msra.mxu0 0.0
  %580 = vmatprep.subr.mxu0 0.0
  %581 = vmatpush1.msra.mxu0 0.0
  %582 = vmatprep.subr.mxu0 0.0
  %583 = vmatpush1.msra.mxu0 0.0
  %584 = vmatprep.subr.mxu0 0.0
  %585 = vmatpush1.msra.mxu0 0.0
  %586 = vmatprep.subr.mxu0 0.0
  %587 = vmatpush1.msra.mxu0 0.0
  %588 = vmatprep.subr.mxu0 0.0
  %589 = vmatpush1.msra.mxu0 0.0
  %590 = vmatprep.subr.mxu0 0.0
  %591 = vmatpush1.msra.mxu0 0.0
  %592 = vmatprep.subr.mxu0 0.0
  %593 = vmatpush1.msra.mxu0 0.0
  %594 = vmatprep.subr.mxu0 0.0
  %595 = vmatpush1.msra.mxu0 0.0
  %596 = vmatprep.subr.mxu0 0.0
  %597 = vmatpush1.msra.mxu0 0.0
  %598 = vmatprep.subr.mxu0 0.0
  %599 = vmatpush1.msra.mxu0 0.0
  %600 = vmatprep.subr.mxu0 0.0
  %601 = vmatpush1.msra.mxu0 0.0
  %602 = vmatprep.subr.mxu0 0.0
  %603 = vmatpush1.msra.mxu0 0.0
  %604 = vmatprep.subr.mxu0 0.0
  %605 = vmatpush1.msra.mxu0 0.0
  %606 = vmatprep.mubr.f32.mxu0 0.0
  %607 = vmatmul.mubr.f32.gmra.mrb[0].mxu0 %v27
  %v608 = vpop.f32.mrb[0].mxu0
  %v609 = vadd.f32 %v43, %v608
  %v610 = vpop.f32.mrb[0].mxu0
  %611 = vmatprep.mubr.f32.mxu0 0.0
  %612 = vmatmul.mubr.f32.gmra.mrb[0].mxu0 %v28
  %v613 = vpop.f32.mrb[0].mxu0
  %v614 = vadd.f32 %v44, %v613
  %v615 = vpop.f32.mrb[0].mxu0
  %616 = vmatprep.mubr.f32.mxu0 0.0
  %617 = vmatmul.mubr.f32.gmra.mrb[0].mxu0 %v29
  %v618 = vpop.f32.mrb[0].mxu0
  %v619 = vadd.f32 %v45, %v618
  %v620 = vpop.f32.mrb[0].mxu0
  %621 = vmatprep.mubr.f32.mxu0 0.0
  %622 = vmatmul.mubr.f32.gmra.mrb[0].mxu0 %v30
  %v623 = vpop.f32.mrb[0].mxu0
  %v624 = vadd.f32 %v46, %v623
  %v625 = vpop.f32.mrb[0].mxu0
  %626 = vmatprep.mubr.f32.mxu0 0.0
  %627 = vmatmul.mubr.f32.gmra.mrb[0].mxu0 %v31
  %v628 = vpop.f32.mrb[0].mxu0
  %v629 = vadd.f32 %v47, %v628
  %v630 = vpop.f32.mrb[0].mxu0
  %631 = vmatprep.mubr.f32.mxu0 0.0
  %632 = vmatmul.mubr.f32.gmra.mrb[0].mxu0 %v32
  %v633 = vpop.f32.mrb[0].mxu0
  %v634 = vadd.f32 %v48, %v633
  %v635 = vpop.f32.mrb[0].mxu0
  %636 = vmatprep.mubr.f32.mxu0 0.0
  %637 = vmatmul.mubr.f32.gmra.mrb[0].mxu0 %v33
  %v638 = vpop.f32.mrb[0].mxu0
  %v639 = vadd.f32 %v49, %v638
  %v640 = vpop.f32.mrb[0].mxu0
  %641 = vmatprep.mubr.f32.mxu0 0.0
  %642 = vmatmul.mubr.f32.gmra.mrb[0].mxu0 %v34
  %v643 = vpop.f32.mrb[0].mxu0
  %v644 = vadd.f32 %v50, %v643
  %v645 = vpop.f32.mrb[0].mxu0
  %646 = vmatprep.mubr.f32.mxu0 0.0
  %647 = vmatmul.mubr.f32.gmra.mrb[0].mxu0 %v35
  %v648 = vpop.f32.mrb[0].mxu0
  %v649 = vadd.f32 %v51, %v648
  %v650 = vpop.f32.mrb[0].mxu0
  %651 = vmatprep.mubr.f32.mxu0 0.0
  %652 = vmatmul.mubr.f32.gmra.mrb[0].mxu0 %v36
  %v653 = vpop.f32.mrb[0].mxu0
  %v654 = vadd.f32 %v52, %v653
  %v655 = vpop.f32.mrb[0].mxu0
  %656 = vmatprep.mubr.f32.mxu0 0.0
  %657 = vmatmul.mubr.f32.gmra.mrb[0].mxu0 %v37
  %v658 = vpop.f32.mrb[0].mxu0
  %v659 = vadd.f32 %v53, %v658
  %v660 = vpop.f32.mrb[0].mxu0
  %661 = vmatprep.mubr.f32.mxu0 0.0
  %662 = vmatmul.mubr.f32.gmra.mrb[0].mxu0 %v38
  %v663 = vpop.f32.mrb[0].mxu0
  %v664 = vadd.f32 %v54, %v663
  %v665 = vpop.f32.mrb[0].mxu0
  %666 = vmatprep.mubr.f32.mxu0 0.0
  %667 = vmatmul.mubr.f32.gmra.mrb[0].mxu0 %v39
  %v668 = vpop.f32.mrb[0].mxu0
  %v669 = vadd.f32 %v55, %v668
  %v670 = vpop.f32.mrb[0].mxu0
  %671 = vmatprep.mubr.f32.mxu0 0.0
  %672 = vmatmul.mubr.f32.gmra.mrb[0].mxu0 %v40
  %v673 = vpop.f32.mrb[0].mxu0
  %v674 = vadd.f32 %v56, %v673
  %v675 = vpop.f32.mrb[0].mxu0
  %676 = vmatprep.mubr.f32.mxu0 0.0
  %677 = vmatmul.mubr.f32.gmra.mrb[0].mxu0 %v41
  %v678 = vpop.f32.mrb[0].mxu0
  %v679 = vadd.f32 %v57, %v678
  %v680 = vpop.f32.mrb[0].mxu0
  %681 = vmatprep.mubr.f32.mxu0 0.0
  %682 = vmatmul.mubr.f32.gmra.mrb[0].mxu0 %v42
  %v683 = vpop.f32.mrb[0].mxu0
  %v684 = vadd.f32 %v58, %v683
  %v685 = vpop.f32.mrb[0].mxu0
  %686 = vdwg.mxu0
  %v687 = vmax.f32 %v609, 0.0
  %v688 = vmax.f32 %v614, 0.0
  %v689 = vmax.f32 %v619, 0.0
  %v690 = vmax.f32 %v624, 0.0
  %v691 = vmax.f32 %v629, 0.0
  %v692 = vmax.f32 %v634, 0.0
  %v693 = vmax.f32 %v639, 0.0
  %v694 = vmax.f32 %v644, 0.0
  %v695 = vmax.f32 %v649, 0.0
  %v696 = vmax.f32 %v654, 0.0
  %v697 = vmax.f32 %v659, 0.0
  %v698 = vmax.f32 %v664, 0.0
  %v699 = vmax.f32 %v669, 0.0
  %v700 = vmax.f32 %v674, 0.0
  %v701 = vmax.f32 %v679, 0.0
  %v702 = vmax.f32 %v684, 0.0
  %703 = vst [vmem:[%s2] sm:$0xff] %v687
  %704 = vst [vmem:[%s2 + $0x8] sm:$0xff] %v688
  %705 = vst [vmem:[%s2 + $0x10] sm:$0xff] %v689
  %706 = vst [vmem:[%s2 + $0x18] sm:$0xff] %v690
  %707 = vst [vmem:[%s2 + $0x20] sm:$0xff] %v691
  %708 = vst [vmem:[%s2 + $0x28] sm:$0xff] %v692
  %709 = vst [vmem:[%s2 + $0x30] sm:$0xff] %v693
  %710 = vst [vmem:[%s2 + $0x38] sm:$0xff] %v694
  %711 = vst [vmem:[%s2 + $0x40] sm:$0xff] %v695
  %712 = vst [vmem:[%s2 + $0x48] sm:$0xff] %v696
  %713 = vst [vmem:[%s2 + $0x50] sm:$0xff] %v697
  %714 = vst [vmem:[%s2 + $0x58] sm:$0xff] %v698
  %715 = vst [vmem:[%s2 + $0x60] sm:$0xff] %v699
  %716 = vst [vmem:[%s2 + $0x68] sm:$0xff] %v700
  %717 = vst [vmem:[%s2 + $0x70] sm:$0xff] %v701
  %718 = vst [vmem:[%s2 + $0x78] sm:$0xff] %v702
  // Predicated region
  $region10: #{unfolding_and_attention_forward.1} parent=0 // pred_check
    _
  $region11: #{unfolding_and_attention_forward.1} parent=0 // pred_check_branch
    %720 = sbr.rel (0) target = $region13
  $region12: #{unfolding_and_attention_forward.1} parent=0 // pred_region
    _
  $region13: #{unfolding_and_attention_forward.1} parent=0 // pred_fallthru
    _
  // Predicated region
  $region14: #{unfolding_and_attention_forward.1} parent=0 // pred_check
    _
  $region15: #{unfolding_and_attention_forward.1} parent=0 // pred_check_branch
    %722 = sbr.rel (0) target = $region17
  $region16: #{unfolding_and_attention_forward.1} parent=0 // pred_region
    _
  $region17: #{unfolding_and_attention_forward.1} parent=0 // pred_fallthru
    _

</llo_original>
